<compile_context>
chip_gen: v7x
topology: tpu7x:2x2x1
jax: 0.10.0
libtpu: 0.0.40
codegen_flags: <defaults>
</compile_context>

<pallas_src>
import functools

import jax
import jax.numpy as jnp
from jax.experimental import pallas as pl
from jax.experimental.pallas import tpu as pltpu

EPS = 1e-6  # matches the module default eps=1e-06


# ----------------------------------------------------------------------------
# shared math (pure jnp, usable both inside kernels and in the reference)
# ----------------------------------------------------------------------------
def _layernorm(x, gamma, beta, eps=EPS):
    mean = jnp.mean(x, axis=-1, keepdims=True)
    var = jnp.mean(jnp.square(x - mean), axis=-1, keepdims=True)
    return (x - mean) * jax.lax.rsqrt(var + eps) * gamma + beta


# ----------------------------------------------------------------------------
# kernel 1: patch embed + pos embed + cls tokens + sublane padding
# ----------------------------------------------------------------------------
def embed_kernel(patches_ref, pw_ref, pb_ref, pos_ref, cls_ref, x0_ref, *,
                 num_cls, s_real):
    B, Np, P = patches_ref.shape
    D = pw_ref.shape[1]
    S_pad = x0_ref.shape[1]
    emb = jnp.dot(patches_ref[...].reshape(B * Np, P), pw_ref[...],
                  preferred_element_type=jnp.float32)
    emb = emb + pb_ref[...]
    emb = emb.reshape(B, Np, D) + pos_ref[...][None]
    x0_ref[:, 0:num_cls, :] = jnp.broadcast_to(cls_ref[...][None],
                                               (B, num_cls, D))
    x0_ref[:, num_cls:s_real, :] = emb
    if s_real < S_pad:  # static: padded token rows start as exact zeros
        x0_ref[:, s_real:, :] = jnp.zeros((B, S_pad - s_real, D), jnp.float32)


# ----------------------------------------------------------------------------
# kernel 2: the whole depth loop — one grid step == one transformer layer
# ----------------------------------------------------------------------------
def fused_blocks_kernel(
    x0_ref,
    g1_ref, b1_ref, wqkv_ref, bqkv_ref, wproj_ref, bproj_ref,
    g2_ref, b2_ref, w1_ref, bm1_ref, w2_ref, bm2_ref,
    ng_ref, nb_ref,
    o_ref, x_scr,
    *, num_heads, s_real,
):
    l = pl.program_id(0)
    B, S_pad, D = x_scr.shape
    BS = B * S_pad
    H = num_heads
    hd = D // H
    scale = hd ** -0.5
    S_kpad = ((S_pad + 127) // 128) * 128       # lane-dense key axis

    # ---- grid step 0: copy the pre-embedded residual into resident scratch -
    @pl.when(l == 0)
    def _init():
        x_scr[...] = x0_ref[...]

    xf = x_scr[...].reshape(BS, D)              # fold batch into matmul M dim

    def mm(a_f32, w_bf16):                      # bf16 MXU operands, f32 acc
        return jnp.dot(a_f32.astype(jnp.bfloat16), w_bf16,
                       preferred_element_type=jnp.float32)

    # ---------------- attention branch (pre-norm) ----------------
    h = _layernorm(xf, g1_ref[0], b1_ref[0])                  # f32 statistics
    qkv = mm(h, wqkv_ref[0]) + bqkv_ref[0]                    # (BS, 3D) f32

    def to_heads(t):                            # (BS, D) -> (B*H, S_pad, hd)
        return (t.reshape(B, S_pad, H, hd)
                 .transpose(0, 2, 1, 3)
                 .reshape(B * H, S_pad, hd))

    q = to_heads(qkv[:, 0 * D:1 * D])
    k = to_heads(qkv[:, 1 * D:2 * D])
    v = to_heads(qkv[:, 2 * D:3 * D])

    # pad the KEY axis to a multiple of 128 lanes; padded keys are masked
    if S_kpad > S_pad:
        zpad = jnp.zeros((B * H, S_kpad - S_pad, hd), jnp.float32)
        k = jnp.concatenate([k, zpad], axis=1)
        v = jnp.concatenate([v, zpad], axis=1)
    if s_real < S_kpad:
        col = jax.lax.broadcasted_iota(jnp.int32, (1, 1, S_kpad), 2)
        key_mask = jnp.where(col >= s_real, jnp.float32(-1e30),
                             jnp.float32(0.0))
    else:
        key_mask = jnp.float32(0.0)

    # one batched QK^T / PV einsum for all heads (no per-head lane slicing)
    s = jnp.einsum("bqd,bkd->bqk", q.astype(jnp.bfloat16),
                   k.astype(jnp.bfloat16),
                   preferred_element_type=jnp.float32) * scale
    s = s + key_mask
    s = s - jnp.max(s, axis=-1, keepdims=True)
    p = jnp.exp(s)                                            # f32 softmax
    p = p * pl.reciprocal(jnp.sum(p, axis=-1, keepdims=True), approx=True)
    oh = jnp.einsum("bqk,bkd->bqd", p.astype(jnp.bfloat16),
                    v.astype(jnp.bfloat16),
                    preferred_element_type=jnp.float32)       # (B*H,S_pad,hd)

    # merge heads lane-contiguously -> ONE full-D output projection matmul
    attn = oh.reshape(B, H, S_pad, hd).transpose(0, 2, 1, 3).reshape(BS, D)
    xf = xf + mm(attn, wproj_ref[0]) + bproj_ref[0]

    # ---------------- MLP branch (pre-norm) ----------------
    h = _layernorm(xf, g2_ref[0], b2_ref[0])
    h = mm(h, w1_ref[0]) + bm1_ref[0]
    h = jax.nn.gelu(h, approximate=False)       # exact erf == nn.GELU default
    xf = xf + mm(h, w2_ref[0]) + bm2_ref[0]

    x_scr[...] = xf.reshape(B, S_pad, D)
    if s_real < S_pad:  # keep padded token rows exactly zero every layer
        x_scr[:, s_real:, :] = jnp.zeros((B, S_pad - s_real, D), jnp.float32)

    # ---- last grid step: final LayerNorm, write ONLY the real rows ---------
    @pl.when(l == pl.num_programs(0) - 1)
    def _final():
        y = _layernorm(xf, ng_ref[...], nb_ref[...])
        o_ref[...] = y.reshape(B, S_pad, D)[:, 0:s_real, :]


# ----------------------------------------------------------------------------
# pallas_call wrappers
# ----------------------------------------------------------------------------
def fused_vit_call(patches, params, *, num_heads, num_cls_tokens,
                   vmem_limit_bytes=48 * 1024 * 1024):
    B, Np, P = patches.shape
    D = params["patch_w"].shape[1]
    blk = params["blk"]
    L = blk["wqkv"].shape[0]
    Hm = blk["w1"].shape[2]
    s_real = Np + num_cls_tokens
    s_pad = ((s_real + 7) // 8) * 8             # query/token sublane padding

    # stage 1: patch embed (+pos +cls +pad) -> initial residual
    x0 = pl.pallas_call(
        functools.partial(embed_kernel, num_cls=num_cls_tokens, s_real=s_real),
        out_shape=jax.ShapeDtypeStruct((B, s_pad, D), jnp.float32),
    )(patches, params["patch_w"], params["patch_b"], params["pos"],
      params["cls"])

    def const(shape):
        n = len(shape)
        return pl.BlockSpec(shape, lambda l, _n=n: (0,) * _n)

    def per_layer(tail):
        n = len(tail)
        return pl.BlockSpec((1,) + tail, lambda l, _n=n: (l,) + (0,) * _n)

    kernel = functools.partial(fused_blocks_kernel, num_heads=num_heads,
                               s_real=s_real)

    # stage 2: all transformer blocks + final LN in one fused call
    out = pl.pallas_call(
        kernel,
        out_shape=jax.ShapeDtypeStruct((B, s_real, D), jnp.float32),
        grid_spec=pltpu.PrefetchScalarGridSpec(
            num_scalar_prefetch=0,
            grid=(L,),
            in_specs=[
                const((B, s_pad, D)),          # x0 (initial residual)
                per_layer((1, D)),             # g1
                per_layer((1, D)),             # b1
                per_layer((D, 3 * D)),         # wqkv   (bf16)
                per_layer((1, 3 * D)),         # bqkv
                per_layer((D, D)),             # wproj  (bf16)
                per_layer((1, D)),             # bproj
                per_layer((1, D)),             # g2
                per_layer((1, D)),             # b2
                per_layer((D, Hm)),            # w1     (bf16)
                per_layer((1, Hm)),            # bm1
                per_layer((Hm, D)),            # w2     (bf16)
                per_layer((1, D)),             # bm2
                const((1, D)),                 # norm_g
                const((1, D)),                 # norm_b
            ],
            out_specs=pl.BlockSpec((B, s_real, D), lambda l: (0, 0, 0)),
            scratch_shapes=[pltpu.VMEM((B, s_pad, D), jnp.float32)],
        ),
        compiler_params=pltpu.CompilerParams(
            dimension_semantics=("arbitrary",),        # layers are sequential
            vmem_limit_bytes=vmem_limit_bytes,
        ),
    )(x0,
      blk["g1"], blk["b1"], blk["wqkv"], blk["bqkv"], blk["wproj"],
      blk["bproj"], blk["g2"], blk["b2"], blk["w1"], blk["bm1"],
      blk["w2"], blk["bm2"],
      params["norm_g"], params["norm_b"])
    return out


# ----------------------------------------------------------------------------
# glue: patchify (im2col for the stride=kernel conv) — pure layout, plain JAX
# ----------------------------------------------------------------------------
def patchify(x, p):
    # x: (B, C, H, W) NCHW -> (B, Hp*Wp, C*p*p); patch vector order (C, ph, pw)
    # matches torch Conv2d weight.reshape(dim, -1).
    B, C, H, W = x.shape
    Hp, Wp = H // p, W // p
    x = x.reshape(B, C, Hp, p, Wp, p)
    x = x.transpose(0, 2, 4, 1, 3, 5)
    return x.reshape(B, Hp * Wp, C * p * p)


def prenorm_vit_forward(x, params, *, patch_size, num_heads, num_cls_tokens):
    patches = patchify(x, patch_size)
    return fused_vit_call(patches, params, num_heads=num_heads,
                          num_cls_tokens=num_cls_tokens)


# ----------------------------------------------------------------------------
# deterministic parameter init (synthetic — shapes follow the nn.Module),
# per-layer weights stacked along a leading depth axis; matmul weights in bf16
# ----------------------------------------------------------------------------
def init_params(key, patch_size, dim, depth, num_heads, input_shape,
                num_cls_tokens, mlp_hidden_dim=None):
    C, H, W = input_shape
    P = C * patch_size * patch_size
    Np = (H // patch_size) * (W // patch_size)
    Hm = mlp_hidden_dim if mlp_hidden_dim is not None else 4 * dim

    def nrm(k, shape, std=0.02, dtype=jnp.float32):
        w = std * jax.random.normal(k, shape, dtype=jnp.float32)
        return w.astype(dtype)

    keys = jax.random.split(key, 12)
    bf16 = jnp.bfloat16
    return {
        # conv weight (dim, C, p, p) flattened & transposed -> (C*p*p, dim)
        "patch_w": nrm(keys[0], (P, dim)),
        "patch_b": nrm(keys[1], (1, dim)),
        "pos": nrm(keys[2], (Np, dim)),
        "cls": nrm(keys[3], (num_cls_tokens, dim)),
        "norm_g": jnp.ones((1, dim), jnp.float32),
        "norm_b": jnp.zeros((1, dim), jnp.float32),
        "blk": {
            "g1": jnp.ones((depth, 1, dim), jnp.float32),
            "b1": jnp.zeros((depth, 1, dim), jnp.float32),
            "wqkv": nrm(keys[4], (depth, dim, 3 * dim), dtype=bf16),
            "bqkv": nrm(keys[5], (depth, 1, 3 * dim)),
            "wproj": nrm(keys[6], (depth, dim, dim), dtype=bf16),
            "bproj": nrm(keys[7], (depth, 1, dim)),
            "g2": jnp.ones((depth, 1, dim), jnp.float32),
            "b2": jnp.zeros((depth, 1, dim), jnp.float32),
            "w1": nrm(keys[8], (depth, dim, Hm), dtype=bf16),
            "bm1": nrm(keys[9], (depth, 1, Hm)),
            "w2": nrm(keys[10], (depth, Hm, dim), dtype=bf16),
            "bm2": nrm(keys[11], (depth, 1, dim)),
        },
    }


# ----------------------------------------------------------------------------
# pure-JAX reference (mirrors the kernel's bf16-at-matmul-boundary math)
# ----------------------------------------------------------------------------
def _mm_bf16(a, w):
    return jnp.dot(a.astype(jnp.bfloat16), w.astype(jnp.bfloat16),
                   preferred_element_type=jnp.float32)


def _ref_block(x, p, num_heads):
    B, S, D = x.shape
    H = num_heads
    hd = D // H
    scale = hd ** -0.5
    h = _layernorm(x, p["g1"][0], p["b1"][0])
    qkv = _mm_bf16(h, p["wqkv"]) + p["bqkv"]
    q, k, v = qkv[..., :D], qkv[..., D:2 * D], qkv[..., 2 * D:]

    def split(t):
        return t.reshape(B, S, H, hd).transpose(0, 2, 1, 3)

    q, k, v = split(q), split(k), split(v)
    s = jnp.einsum("bhqd,bhkd->bhqk", q.astype(jnp.bfloat16),
                   k.astype(jnp.bfloat16),
                   preferred_element_type=jnp.float32) * scale
    a = jax.nn.softmax(s, axis=-1)
    o = jnp.einsum("bhqk,bhkd->bhqd", a.astype(jnp.bfloat16),
                   v.astype(jnp.bfloat16),
                   preferred_element_type=jnp.float32)
    o = o.transpose(0, 2, 1, 3).reshape(B, S, D)
    x = x + _mm_bf16(o, p["wproj"]) + p["bproj"]
    h = _layernorm(x, p["g2"][0], p["b2"][0])
    h = jax.nn.gelu(_mm_bf16(h, p["w1"]) + p["bm1"], approximate=False)
    return x + _mm_bf16(h, p["w2"]) + p["bm2"]


def reference_forward(x, params, *, patch_size, num_heads, num_cls_tokens):
    B = x.shape[0]
    dim = params["patch_w"].shape[1]
    patches = patchify(x, patch_size)
    with jax.default_matmul_precision("highest"):
        h = patches @ params["patch_w"] + params["patch_b"] + params["pos"][None]
    cls = jnp.broadcast_to(params["cls"][None], (B, num_cls_tokens, dim))
    h = jnp.concatenate([cls, h], axis=1)
    depth = params["blk"]["wqkv"].shape[0]
    for l in range(depth):
        p = {k: v[l] for k, v in params["blk"].items()}
        h = _ref_block(h, p, num_heads)
    return _layernorm(h, params["norm_g"][0], params["norm_b"][0])


# ----------------------------------------------------------------------------
if __name__ == "__main__":
    patch_size = 4
    dim = 32
    depth = 2
    num_heads = 4
    input_shape = (3, 16, 16)   # (C, H, W)
    num_cls_tokens = 1
    batch = 2

    root = jax.random.PRNGKey(0)
    xkey, pkey = jax.random.split(root)
    x = jax.random.normal(xkey, (batch,) + input_shape, dtype=jnp.float32)
    params = init_params(pkey, patch_size, dim, depth, num_heads,
                         input_shape, num_cls_tokens)

    out = prenorm_vit_forward(
        x, params, patch_size=patch_size, num_heads=num_heads,
        num_cls_tokens=num_cls_tokens)
    out = jax.block_until_ready(out)

    num_patches = (input_shape[1] // patch_size) * (input_shape[2] // patch_size)
    assert out.shape == (batch, num_patches + num_cls_tokens, dim), out.shape

    ref = reference_forward(
        x, params, patch_size=patch_size, num_heads=num_heads,
        num_cls_tokens=num_cls_tokens)
    max_err = float(jnp.max(jnp.abs(out - ref)))
    assert max_err < 2e-2, f"mismatch vs reference: {max_err}"

    print("KERNEL_OK")
</pallas_src>

<mosaic_0001>
module attributes {stable_mosaic.version = 11 : i64} {
  func.func @embed_kernel(%arg0: memref<2x16x48xf32, #tpu.memory_space<vmem>>, %arg1: memref<48x32xf32, #tpu.memory_space<vmem>>, %arg2: memref<1x32xf32, #tpu.memory_space<vmem>>, %arg3: memref<16x32xf32, #tpu.memory_space<vmem>>, %arg4: memref<1x32xf32, #tpu.memory_space<vmem>>, %arg5: memref<2x24x32xf32, #tpu.memory_space<vmem>>) attributes {dimension_semantics = [], scalar_prefetch = 0 : i64, scratch_operands = 0 : i64, tpu.core_type = #tpu.core_type<tc>} {
    %c0 = arith.constant 0 : index
    %c0_0 = arith.constant 0 : index
    %c0_1 = arith.constant 0 : index
    %0 = vector.load %arg0[%c0, %c0_0, %c0_1] : memref<2x16x48xf32, #tpu.memory_space<vmem>>, vector<2x16x48xf32>
    %1 = vector.shape_cast %0 : vector<2x16x48xf32> to vector<32x48xf32>
    %c0_2 = arith.constant 0 : index
    %c0_3 = arith.constant 0 : index
    %2 = vector.load %arg1[%c0_2, %c0_3] : memref<48x32xf32, #tpu.memory_space<vmem>>, vector<48x32xf32>
    %cst = arith.constant dense<0.000000e+00> : vector<32x32xf32>
    %3 = tpu.matmul %1, %2, %cst {dimension_numbers = #tpu.dot_dimension_numbers<[1], [0], [0], [1], [0, 0, 1, 1], [], []>} : vector<32x48xf32>, vector<48x32xf32>, vector<32x32xf32> -> vector<32x32xf32>
    %c0_4 = arith.constant 0 : index
    %c0_5 = arith.constant 0 : index
    %4 = vector.load %arg2[%c0_4, %c0_5] : memref<1x32xf32, #tpu.memory_space<vmem>>, vector<1x32xf32>
    %5 = vector.broadcast %4 : vector<1x32xf32> to vector<32x32xf32>
    %6 = arith.addf %3, %5 : vector<32x32xf32>
    %7 = vector.shape_cast %6 : vector<32x32xf32> to vector<2x16x32xf32>
    %c0_6 = arith.constant 0 : index
    %c0_7 = arith.constant 0 : index
    %8 = vector.load %arg3[%c0_6, %c0_7] : memref<16x32xf32, #tpu.memory_space<vmem>>, vector<16x32xf32>
    %9 = vector.shape_cast %8 : vector<16x32xf32> to vector<1x16x32xf32>
    %10 = vector.broadcast %9 : vector<1x16x32xf32> to vector<2x16x32xf32>
    %11 = arith.addf %7, %10 : vector<2x16x32xf32>
    %c0_8 = arith.constant 0 : index
    %c0_9 = arith.constant 0 : index
    %12 = vector.load %arg4[%c0_8, %c0_9] : memref<1x32xf32, #tpu.memory_space<vmem>>, vector<1x32xf32>
    %13 = vector.shape_cast %12 : vector<1x32xf32> to vector<1x1x32xf32>
    %14 = vector.shape_cast %13 : vector<1x1x32xf32> to vector<1x1x32xf32>
    %15 = vector.broadcast %14 : vector<1x1x32xf32> to vector<2x1x32xf32>
    %c0_10 = arith.constant 0 : index
    %c0_11 = arith.constant 0 : index
    %c0_12 = arith.constant 0 : index
    %16 = vector.load %arg5[%c0_10, %c0_11, %c0_12] : memref<2x24x32xf32, #tpu.memory_space<vmem>>, vector<2x1x32xf32>
    tpu.vector_store %arg5[%c0_10, %c0_11, %c0_12], %15 {strides = array<i32>} : memref<2x24x32xf32, #tpu.memory_space<vmem>>, vector<2x1x32xf32>,
    %c0_13 = arith.constant 0 : index
    %c1 = arith.constant 1 : index
    %c0_14 = arith.constant 0 : index
    %17 = vector.load %arg5[%c0_13, %c1, %c0_14] : memref<2x24x32xf32, #tpu.memory_space<vmem>>, vector<2x16x32xf32>
    tpu.vector_store %arg5[%c0_13, %c1, %c0_14], %11 {strides = array<i32>} : memref<2x24x32xf32, #tpu.memory_space<vmem>>, vector<2x16x32xf32>,
    %cst_15 = arith.constant 0.000000e+00 : f32
    %18 = vector.broadcast %cst_15 : f32 to vector<2x7x32xf32>
    %c0_16 = arith.constant 0 : index
    %c17 = arith.constant 17 : index
    %c0_17 = arith.constant 0 : index
    %19 = vector.load %arg5[%c0_16, %c17, %c0_17] : memref<2x24x32xf32, #tpu.memory_space<vmem>>, vector<2x7x32xf32>
    tpu.vector_store %arg5[%c0_16, %c17, %c0_17], %18 {strides = array<i32>} : memref<2x24x32xf32, #tpu.memory_space<vmem>>, vector<2x7x32xf32>,
    return
  }
}

</mosaic_0001>

<llo_original>
// kernel: tpu_custom_call.1
$region0: #{tpu_custom_call.1}
  #allocation0 [shape = 'u32[]', space=smem, size = 0x4, offset = 0x4, fixed_abs, tag = 'smem constant byte address 0x4 - core index']
  #allocation1 [shape = 'u32[144,128]{1,0:T(1,128)}', space=vmem, size = 0x12000, scoped, tag = 'internal scratch']
  %s0 = inlined_call_operand.vmem [shape: f32[2,16,48], index: 0, kind: input, shape index: {}]
  %s1 = inlined_call_operand.vmem [shape: f32[48,32], index: 1, kind: input, shape index: {}]
  %s2 = inlined_call_operand.vmem [shape: f32[1,32], index: 2, kind: input, shape index: {}]
  %s3 = inlined_call_operand.vmem [shape: f32[16,32], index: 3, kind: input, shape index: {}]
  %s4 = inlined_call_operand.vmem [shape: f32[1,32], index: 4, kind: input, shape index: {}]
  %s5 = inlined_call_operand.hbm [shape: f32[2,24,32], index: 5, kind: output, shape index: {}]
  %s6 = sld [smem:[#allocation0]]
  $region30: #{tpu_custom_call.1} parent=0
    _
  %s8 = ssub.s32 1, %s6
  %s9 = scalar_select 0, %s8, %s6
  $region1: #{tpu_custom_call.1} parent=0
    #allocation2 [shape = 'u8[24576]{0}', space=vmem, size = 0x6000, scoped, tag = 'output window, operand 0, single buffered']
    #allocation3 [shape = 's32[1]{0}', space=sflag, size = 0x4, scoped, tag = 'scoped memory for tpu_custom_call.1']
    %10 = vsyncpa [#allocation3], 0
    // Predicated region
    $region2: #{tpu_custom_call.1} parent=1 // pred_check
      _
    $region3: #{tpu_custom_call.1} parent=1 // pred_check_branch
      %12 = sbr.rel (0) target = $region5
    $region4: #{tpu_custom_call.1} parent=1 // pred_region
      _
    $region5: #{tpu_custom_call.1} parent=1 // pred_fallthru
      _
    // Predicated region
    $region6: #{tpu_custom_call.1} parent=1 // pred_check
      _
    $region7: #{tpu_custom_call.1} parent=1 // pred_check_branch
      %14 = sbr.rel (0) target = $region9
    $region8: #{tpu_custom_call.1} parent=1 // pred_region
      _
    $region9: #{tpu_custom_call.1} parent=1 // pred_fallthru
      _
    // Predicated region
    $region10: #{tpu_custom_call.1} parent=1 // pred_check
      _
    $region11: #{tpu_custom_call.1} parent=1 // pred_check_branch
      %16 = sbr.rel (0) target = $region13
    $region12: #{tpu_custom_call.1} parent=1 // pred_region
      _
    $region13: #{tpu_custom_call.1} parent=1 // pred_fallthru
      _
    // Predicated region
    $region14: #{tpu_custom_call.1} parent=1 // pred_check
      _
    $region15: #{tpu_custom_call.1} parent=1 // pred_check_branch
      %18 = sbr.rel (0) target = $region17
    $region16: #{tpu_custom_call.1} parent=1 // pred_region
      _
    $region17: #{tpu_custom_call.1} parent=1 // pred_fallthru
      _
    // Predicated region
    $region18: #{tpu_custom_call.1} parent=1 // pred_check
      _
    $region19: #{tpu_custom_call.1} parent=1 // pred_check_branch
      %20 = sbr.rel (0) target = $region21
    $region20: #{tpu_custom_call.1} parent=1 // pred_region
      _
    $region21: #{tpu_custom_call.1} parent=1 // pred_fallthru
      _
    %v21 = vld [vmem:[%s0] sm:$0xff]
    %v22 = vld [vmem:[%s0 + $0x8] sm:$0xff]
    %v23 = vld [vmem:[%s0 + $0x10] sm:$0xff]
    %v24 = vld [vmem:[%s0 + $0x18] sm:$0xff]
    %v25 = vld [vmem:[%s1] sm:$0xff]
    %v26 = vld [vmem:[%s1 + $0x8] sm:$0xff]
    %v27 = vld [vmem:[%s1 + $0x10] sm:$0xff]
    %v28 = vld [vmem:[%s1 + $0x18] sm:$0xff]
    %v29 = vld [vmem:[%s1 + $0x20] sm:$0xff]
    %v30 = vld [vmem:[%s1 + $0x28] sm:$0xff]
    %v31 = vld [vmem:[%s2] sm:$0x1]
    %v33 = vlaneseq
    %v34 = vshrl.u32 %v33, 7
    %v35 = vsub.s32 0, %v34
    %v36 = vrot.slane %v31, %v35
    %vm38 = vcmask 392192
    %v40 = vsel %vm38, %v21, 0
    %v43 = vsel %vm38, %v22, 0
    %v46 = vsel %vm38, %v23, 0
    %v49 = vsel %vm38, %v24, 0
    %51 = vmatprep.subr.mxu0 0.0
    %52 = vmatpush1.msra.mxu0 %v25
    %53 = vmatprep.subr.mxu0 0.0
    %54 = vmatpush1.msra.mxu0 %v26
    %55 = vmatprep.subr.mxu0 0.0
    %56 = vmatpush1.msra.mxu0 %v27
    %57 = vmatprep.subr.mxu0 0.0
    %58 = vmatpush1.msra.mxu0 %v28
    %59 = vmatprep.subr.mxu0 0.0
    %60 = vmatpush1.msra.mxu0 %v29
    %61 = vmatprep.subr.mxu0 0.0
    %62 = vmatpush1.msra.mxu0 %v30
    %63 = vmatprep.subr.mxu0 0.0
    %64 = vmatpush1.msra.mxu0 0.0
    %65 = vmatprep.subr.mxu0 0.0
    %66 = vmatpush1.msra.mxu0 0.0
    %67 = vmatprep.subr.mxu0 0.0
    %68 = vmatpush1.msra.mxu0 0.0
    %69 = vmatprep.subr.mxu0 0.0
    %70 = vmatpush1.msra.mxu0 0.0
    %71 = vmatprep.subr.mxu0 0.0
    %72 = vmatpush1.msra.mxu0 0.0
    %73 = vmatprep.subr.mxu0 0.0
    %74 = vmatpush1.msra.mxu0 0.0
    %75 = vmatprep.subr.mxu0 0.0
    %76 = vmatpush1.msra.mxu0 0.0
    %77 = vmatprep.subr.mxu0 0.0
    %78 = vmatpush1.msra.mxu0 0.0
    %79 = vmatprep.subr.mxu0 0.0
    %80 = vmatpush1.msra.mxu0 0.0
    %81 = vmatprep.subr.mxu0 0.0
    %82 = vmatpush1.msra.mxu0 0.0
    %83 = vmatprep.subr.mxu0 0.0
    %84 = vmatpush1.msra.mxu0 0.0
    %85 = vmatprep.subr.mxu0 0.0
    %86 = vmatpush1.msra.mxu0 0.0
    %87 = vmatprep.subr.mxu0 0.0
    %88 = vmatpush1.msra.mxu0 0.0
    %89 = vmatprep.subr.mxu0 0.0
    %90 = vmatpush1.msra.mxu0 0.0
    %91 = vmatprep.subr.mxu0 0.0
    %92 = vmatpush1.msra.mxu0 0.0
    %93 = vmatprep.subr.mxu0 0.0
    %94 = vmatpush1.msra.mxu0 0.0
    %95 = vmatprep.subr.mxu0 0.0
    %96 = vmatpush1.msra.mxu0 0.0
    %97 = vmatprep.subr.mxu0 0.0
    %98 = vmatpush1.msra.mxu0 0.0
    %99 = vmatprep.subr.mxu0 0.0
    %100 = vmatpush1.msra.mxu0 0.0
    %101 = vmatprep.subr.mxu0 0.0
    %102 = vmatpush1.msra.mxu0 0.0
    %103 = vmatprep.subr.mxu0 0.0
    %104 = vmatpush1.msra.mxu0 0.0
    %105 = vmatprep.subr.mxu0 0.0
    %106 = vmatpush1.msra.mxu0 0.0
    %107 = vmatprep.subr.mxu0 0.0
    %108 = vmatpush1.msra.mxu0 0.0
    %109 = vmatprep.subr.mxu0 0.0
    %110 = vmatpush1.msra.mxu0 0.0
    %111 = vmatprep.subr.mxu0 0.0
    %112 = vmatpush1.msra.mxu0 0.0
    %113 = vmatprep.subr.mxu0 0.0
    %114 = vmatpush1.msra.mxu0 0.0
    %115 = vmatprep.mubr.f32.mxu0 0.0
    %116 = vmatmul.mubr.f32.gmra.mrb[0].mxu0 %v40
    %v117 = vpop.f32.mrb[0].mxu0
    %v118 = vadd.f32 %v36, %v117
    %v119 = vpop.f32.mrb[0].mxu0
    %120 = vmatprep.mubr.f32.mxu0 0.0
    %121 = vmatmul.mubr.f32.gmra.mrb[0].mxu0 %v43
    %v122 = vpop.f32.mrb[0].mxu0
    %v123 = vadd.f32 %v36, %v122
    %v124 = vpop.f32.mrb[0].mxu0
    %125 = vmatprep.mubr.f32.mxu0 0.0
    %126 = vmatmul.mubr.f32.gmra.mrb[0].mxu0 %v46
    %v127 = vpop.f32.mrb[0].mxu0
    %v128 = vadd.f32 %v36, %v127
    %v129 = vpop.f32.mrb[0].mxu0
    %130 = vmatprep.mubr.f32.mxu0 0.0
    %131 = vmatmul.mubr.f32.gmra.mrb[0].mxu0 %v49
    %v132 = vpop.f32.mrb[0].mxu0
    %v133 = vadd.f32 %v36, %v132
    %v134 = vpop.f32.mrb[0].mxu0
    %135 = vdwg.mxu0
    %v136 = vld [vmem:[%s3] sm:$0xff]
    %v137 = vld [vmem:[%s3 + $0x8] sm:$0xff]
    %v138 = vadd.f32 %v118, %v136
    %v139 = vadd.f32 %v123, %v137
    %v140 = vadd.f32 %v128, %v136
    %v141 = vadd.f32 %v133, %v137
    %v142 = vld [vmem:[%s4] sm:$0x1]
    %vm143 = vcmask 253952
    %144 = vst.msk [vmem:[#allocation2] sm:$0x1] %vm143, %v142
    %145 = vst.msk [vmem:[#allocation2 + $0x18] sm:$0x1] %vm143, %v142
    %vm146 = vcmask 261120
    %147 = vst.msk [vmem:[#allocation2 + $0x1] sm:$0xff] %vm146, %v138
    %148 = vst.msk [vmem:[#allocation2 + $0x9] sm:$0xff] %vm146, %v139
    %149 = vst.msk [vmem:[#allocation2 + $0x19] sm:$0xff] %vm146, %v140
    %150 = vst.msk [vmem:[#allocation2 + $0x21] sm:$0xff] %vm146, %v141
    %vm151 = vcmask 260096
    %152 = vst.msk [vmem:[#allocation2 + $0x11] sm:$0x7f] %vm151, 0.0
    %153 = vst.msk [vmem:[#allocation2 + $0x29] sm:$0x7f] %vm151, 0.0
    // Predicated region
    $region22: #{tpu_custom_call.1} parent=1 // pred_check
      _
    $region23: #{tpu_custom_call.1} parent=1 // pred_check_branch
      %155 = sbr.rel (0) target = $region25
    $region24: #{tpu_custom_call.1} parent=1 // pred_region
      %s157 = ssub.s32 768, 768
      %158 = vsyncadd [#allocation3], %s157
      %s159 = sshll.u32 [#allocation2], 4
      %s160 = int_to_ptr.vmem [resolvable:$true] %s159
      %165 = dma.vmem_to_hbm [thread:$0]  %s160, 768, %s5, [#allocation3], 128, 128, 8
    $region25: #{tpu_custom_call.1} parent=1 // pred_fallthru
      _
    // Predicated region
    $region26: #{tpu_custom_call.1} parent=1 // pred_check
      _
    $region27: #{tpu_custom_call.1} parent=1 // pred_check_branch
      %167 = sbr.rel (0) target = $region29
    $region28: #{tpu_custom_call.1} parent=1 // pred_region
      %168 = dma.done [#allocation3], 768
    $region29: #{tpu_custom_call.1} parent=1 // pred_fallthru
      _
    %169 = vsyncpa [#allocation3], 1

</llo_original>
